<compile_context>
chip_gen: v5e
topology: v5e:2x2
jax: 0.10.0
libtpu: 0.0.40
codegen_flags: <defaults>
</compile_context>

<pallas_src>
import functools
import math

import jax
import jax.numpy as jnp
from jax import lax
from jax.experimental import pallas as pl
from jax.experimental.pallas import tpu as pltpu


def _round_up(x, m):
    return ((x + m - 1) // m) * m


# ---------------------------------------------------------------------------
# Kernel 1: fused Q/K/V projection  y = x @ W + b  (scale pre-folded into Wq/bq)
# ---------------------------------------------------------------------------
def qkv_projection_kernel(xq_ref, xk_ref, xv_ref,
                          wq_ref, bq_ref, wk_ref, bk_ref, wv_ref, bv_ref,
                          qp_ref, kp_ref, vp_ref):
    f32 = jnp.float32
    qp = jnp.dot(xq_ref[0], wq_ref[...], preferred_element_type=f32)
    kp = jnp.dot(xk_ref[0], wk_ref[...], preferred_element_type=f32)
    vp = jnp.dot(xv_ref[0], wv_ref[...], preferred_element_type=f32)
    qp_ref[0] = (qp + bq_ref[...].astype(f32)).astype(qp_ref.dtype)
    kp_ref[0] = (kp + bk_ref[...].astype(f32)).astype(kp_ref.dtype)
    vp_ref[0] = (vp + bv_ref[...].astype(f32)).astype(vp_ref.dtype)


# ---------------------------------------------------------------------------
# Kernel 2: flash attention over KV tiles + fused output projection
# ---------------------------------------------------------------------------
def flash_mha_kernel(qp_ref, kp_ref, vp_ref, wo_ref, bo_ref,
                     out_ref,
                     m_ref, l_ref, acc_ref,
                     *, num_heads, head_dim, kv_block, seq_len, needs_kv_mask):
    f32 = jnp.float32
    kv_idx = pl.program_id(2)

    @pl.when(kv_idx == 0)
    def _init():
        m_ref[...] = jnp.full_like(m_ref, -jnp.inf)
        l_ref[...] = jnp.zeros_like(l_ref)
        acc_ref[...] = jnp.zeros_like(acc_ref)

    qp = qp_ref[0]                      # (tq, H)  compute dtype (scale folded)
    kp = kp_ref[0]                      # (tk, H)
    vp = vp_ref[0]                      # (tk, H)

    if needs_kv_mask:                   # static: only when seq was padded
        col = kv_idx * kv_block + lax.broadcasted_iota(
            jnp.int32, (qp.shape[0], kp.shape[0]), 1)
        kv_mask = col < seq_len
    else:
        kv_mask = None

    # Per-head online softmax.  num_heads is small here, so a static unroll is
    # fine; for 16+ heads this would switch to lax.fori_loop (unroll=2-4) or a
    # heads-batched dot_general (head_dim >= 128) to fill the 256-wide MXU.
    for h in range(num_heads):
        lo, hi = h * head_dim, (h + 1) * head_dim
        qh = qp[:, lo:hi]               # (tq, d)
        kh = kp[:, lo:hi]               # (tk, d)
        vh = vp[:, lo:hi]               # (tk, d)

        # scores: contract last dim of both operands — no kh.T relayout.
        s = lax.dot_general(qh, kh, (((1,), (1,)), ((), ())),
                            preferred_element_type=f32)            # (tq, tk)
        if kv_mask is not None:
            s = jnp.where(kv_mask, s, -1e30)

        m_prev = m_ref[:, h:h + 1]                                  # (tq, 1)
        l_prev = l_ref[:, h:h + 1]
        m_new = jnp.maximum(m_prev, jnp.max(s, axis=-1, keepdims=True))
        alpha = jnp.exp(m_prev - m_new)                             # f32 EUP
        p = jnp.exp(s - m_new)                                      # f32 EUP
        m_ref[:, h:h + 1] = m_new
        l_ref[:, h:h + 1] = alpha * l_prev + jnp.sum(p, axis=-1, keepdims=True)
        pv = jnp.dot(p.astype(vh.dtype), vh, preferred_element_type=f32)
        acc_ref[:, lo:hi] = alpha * acc_ref[:, lo:hi] + pv

    @pl.when(kv_idx == pl.num_programs(2) - 1)
    def _finalize():
        # dropout(softmax) == identity in inference mode.
        acc = acc_ref[...]
        out = jnp.zeros((acc.shape[0], wo_ref.shape[1]), f32)
        for h in range(num_heads):
            lo, hi = h * head_dim, (h + 1) * head_dim
            # exact divide: runs once per q tile, negligible cost.
            oh = acc[:, lo:hi] / l_ref[:, h:h + 1]
            out = out + jnp.dot(oh.astype(wo_ref.dtype), wo_ref[lo:hi, :],
                                preferred_element_type=f32)
        out_ref[0] = (out + bo_ref[...].astype(f32)).astype(out_ref.dtype)


# ---------------------------------------------------------------------------
# Wrapper
# ---------------------------------------------------------------------------
def _pick_block(seq_len, preferred):
    if seq_len % preferred == 0:
        return preferred
    if seq_len >= 128:
        return 128                      # pad seq up to a multiple of 128
    return _round_up(seq_len, 8)        # tiny sequences: one sublane-aligned tile


def _vmem_limit(nbytes):
    # 2x headroom over the analytic buffer budget, clamped to [32 MiB, 64 MiB]
    # (<= v7x physical VMEM; v5e/v6e have more).
    return int(min(64 * 2 ** 20, max(32 * 2 ** 20, 2 * nbytes)))


def multi_head_attention(q, k, v, params, *, num_heads,
                         compute_dtype=jnp.bfloat16,
                         q_block=None, kv_block=None):
    """Forward pass of the PyTorch MultiHeadAttention module (inference mode)."""
    B, S, H = q.shape
    assert k.shape == (B, S, H) and v.shape == (B, S, H)
    assert H % num_heads == 0
    head_dim = H // num_heads
    inv_scale = 1.0 / (float(head_dim) ** 0.5)
    out_dtype = q.dtype
    cdt = compute_dtype
    cdt_bytes = jnp.dtype(cdt).itemsize
    out_bytes = jnp.dtype(out_dtype).itemsize

    # ---- tiling / padding ---------------------------------------------------
    if q_block is None:                 # 256-row q tiles fill the 256-wide MXU
        q_block = 256 if S % 256 == 0 else _pick_block(S, 128)
    if kv_block is None:
        kv_block = _pick_block(S, 128)
    s_pad = _round_up(S, math.lcm(q_block, kv_block))

    # ---- host-side prep: pre-cast weights, fold 1/sqrt(d) into Wq/bq --------
    wq = (params["wq"] * inv_scale).astype(cdt)
    bq = (params["bq"] * inv_scale).astype(jnp.float32)
    wk = params["wk"].astype(cdt)
    bk = params["bk"].astype(jnp.float32)
    wv = params["wv"].astype(cdt)
    bv = params["bv"].astype(jnp.float32)
    wo = params["wo"].astype(cdt)
    bo = params["bo"].astype(jnp.float32)

    xq, xk, xv = q.astype(cdt), k.astype(cdt), v.astype(cdt)
    if s_pad != S:
        pad = ((0, 0), (0, s_pad - S), (0, 0))
        xq, xk, xv = (jnp.pad(a, pad) for a in (xq, xk, xv))

    num_s_tiles = s_pad // q_block
    num_kv_tiles = s_pad // kv_block

    # ---- kernel 1: Q/K/V projections (each computed exactly once) -----------
    x_spec = pl.BlockSpec((1, q_block, H), lambda b, i: (b, i, 0))
    w_spec1 = pl.BlockSpec((H, H), lambda b, i: (0, 0),
                           pipeline_mode=pl.Buffered(1))
    b_spec1 = pl.BlockSpec((1, H), lambda b, i: (0, 0),
                           pipeline_mode=pl.Buffered(1))
    proj_vmem = (3 * 2 * q_block * H * cdt_bytes      # xq/xk/xv (double-buffered)
                 + 3 * H * H * cdt_bytes              # weights (single-buffered)
                 + 3 * 2 * max(H, 128) * 4            # biases
                 + 3 * 2 * q_block * H * cdt_bytes)   # qp/kp/vp (double-buffered)
    qp, kp, vp = pl.pallas_call(
        qkv_projection_kernel,
        out_shape=[jax.ShapeDtypeStruct((B, s_pad, H), cdt)] * 3,
        grid_spec=pltpu.PrefetchScalarGridSpec(
            num_scalar_prefetch=0,
            grid=(B, num_s_tiles),
            in_specs=[x_spec, x_spec, x_spec,
                      w_spec1, b_spec1, w_spec1, b_spec1, w_spec1, b_spec1],
            out_specs=[x_spec, x_spec, x_spec]),
        compiler_params=pltpu.CompilerParams(
            dimension_semantics=("parallel", "parallel"),
            vmem_limit_bytes=_vmem_limit(proj_vmem)),
    )(xq, xk, xv, wq, bq, wk, bk, wv, bv)

    # ---- kernel 2: flash attention + fused output projection ----------------
    kernel = functools.partial(
        flash_mha_kernel, num_heads=num_heads, head_dim=head_dim,
        kv_block=kv_block, seq_len=S, needs_kv_mask=(s_pad != S))
    q_spec = pl.BlockSpec((1, q_block, H), lambda b, i, j: (b, i, 0))
    kv_spec = pl.BlockSpec((1, kv_block, H), lambda b, i, j: (b, j, 0))
    wo_spec = pl.BlockSpec((H, H), lambda b, i, j: (0, 0),
                           pipeline_mode=pl.Buffered(1))
    bo_spec = pl.BlockSpec((1, H), lambda b, i, j: (0, 0),
                           pipeline_mode=pl.Buffered(1))
    attn_vmem = (2 * q_block * H * cdt_bytes          # qp (double-buffered)
                 + 2 * 2 * kv_block * H * cdt_bytes   # kp/vp (double-buffered)
                 + H * H * cdt_bytes                  # wo (single-buffered)
                 + 2 * max(H, 128) * 4                # bo
                 + 2 * q_block * H * out_bytes        # out (double-buffered)
                 + q_block * H * 4                    # acc scratch
                 + 2 * q_block * max(num_heads, 128) * 4)  # m/l scratch
    out = pl.pallas_call(
        kernel,
        out_shape=jax.ShapeDtypeStruct((B, s_pad, H), out_dtype),
        grid_spec=pltpu.PrefetchScalarGridSpec(
            num_scalar_prefetch=0,
            grid=(B, num_s_tiles, num_kv_tiles),
            in_specs=[q_spec, kv_spec, kv_spec, wo_spec, bo_spec],
            out_specs=q_spec,
            scratch_shapes=[pltpu.VMEM((q_block, num_heads), jnp.float32),
                            pltpu.VMEM((q_block, num_heads), jnp.float32),
                            pltpu.VMEM((q_block, H), jnp.float32)]),
        compiler_params=pltpu.CompilerParams(
            dimension_semantics=("parallel", "parallel", "arbitrary"),
            vmem_limit_bytes=_vmem_limit(attn_vmem)),
    )(qp, kp, vp, wo, bo)

    if s_pad != S:
        out = out[:, :S, :]
    return out


# ---------------------------------------------------------------------------
# Pure-JAX reference mirroring the PyTorch forward (dropout = identity)
# ---------------------------------------------------------------------------
def reference_mha(q, k, v, params, *, num_heads):
    B, S, H = q.shape
    d = H // num_heads
    scale = float(d) ** 0.5

    def proj(x, w, b):
        return x @ w + b[0]

    def split(x):  # (B,S,H) -> (B,nh,S,d)
        return x.reshape(B, -1, num_heads, d).transpose(0, 2, 1, 3)

    qh = split(proj(q, params["wq"], params["bq"]))
    kh = split(proj(k, params["wk"], params["bk"]))
    vh = split(proj(v, params["wv"], params["bv"]))

    attn = jnp.einsum("bhqd,bhkd->bhqk", qh, kh) / scale
    score = jax.nn.softmax(attn, axis=-1)
    out = jnp.einsum("bhqk,bhkd->bhqd", score, vh)
    out = out.transpose(0, 2, 1, 3).reshape(B, S, H)
    return out @ params["wo"] + params["bo"][0]


if __name__ == "__main__":
    B, S, H = 2, 8, 32
    NUM_HEADS = 4

    key = jax.random.PRNGKey(0)
    keys = jax.random.split(key, 16)

    q = jax.random.normal(keys[0], (B, S, H), dtype=jnp.float32)
    k = jax.random.normal(keys[1], (B, S, H), dtype=jnp.float32)
    v = jax.random.normal(keys[2], (B, S, H), dtype=jnp.float32)

    init_scale = 1.0 / (H ** 0.5)
    params = {
        "wq": jax.random.normal(keys[3], (H, H), jnp.float32) * init_scale,
        "bq": jax.random.normal(keys[4], (1, H), jnp.float32) * init_scale,
        "wk": jax.random.normal(keys[5], (H, H), jnp.float32) * init_scale,
        "bk": jax.random.normal(keys[6], (1, H), jnp.float32) * init_scale,
        "wv": jax.random.normal(keys[7], (H, H), jnp.float32) * init_scale,
        "bv": jax.random.normal(keys[8], (1, H), jnp.float32) * init_scale,
        "wo": jax.random.normal(keys[9], (H, H), jnp.float32) * init_scale,
        "bo": jax.random.normal(keys[10], (1, H), jnp.float32) * init_scale,
    }

    ref = reference_mha(q, k, v, params, num_heads=NUM_HEADS)

    # Default path: bf16 MXU operands, f32 accumulation / softmax.
    out_bf16 = jax.block_until_ready(
        multi_head_attention(q, k, v, params, num_heads=NUM_HEADS))
    assert out_bf16.shape == (B, S, H)
    assert jnp.allclose(out_bf16, ref, atol=5e-2, rtol=5e-2), (
        f"bf16 max abs diff {jnp.max(jnp.abs(out_bf16 - ref))}")

    # Opt-in f32 path: tight check of the flash / online-softmax math.
    out_f32 = jax.block_until_ready(
        multi_head_attention(q, k, v, params, num_heads=NUM_HEADS,
                             compute_dtype=jnp.float32))
    assert jnp.allclose(out_f32, ref, atol=1e-4, rtol=1e-4), (
        f"f32 max abs diff {jnp.max(jnp.abs(out_f32 - ref))}")

    # Non-tile-aligned sequence length exercises the pad + KV-mask path.
    S2 = 10
    q2 = jax.random.normal(keys[11], (B, S2, H), dtype=jnp.float32)
    k2 = jax.random.normal(keys[12], (B, S2, H), dtype=jnp.float32)
    v2 = jax.random.normal(keys[13], (B, S2, H), dtype=jnp.float32)
    ref2 = reference_mha(q2, k2, v2, params, num_heads=NUM_HEADS)
    out2 = jax.block_until_ready(
        multi_head_attention(q2, k2, v2, params, num_heads=NUM_HEADS,
                             compute_dtype=jnp.float32))
    assert out2.shape == (B, S2, H)
    assert jnp.allclose(out2, ref2, atol=1e-4, rtol=1e-4), (
        f"masked max abs diff {jnp.max(jnp.abs(out2 - ref2))}")

    print("KERNEL_OK")
</pallas_src>

<mosaic_0001>
module attributes {stable_mosaic.version = 11 : i64} {
  func.func @qkv_projection_kernel(%arg0: i32, %arg1: i32, %arg2: memref<1x8x32xbf16, #tpu.memory_space<vmem>>, %arg3: memref<1x8x32xbf16, #tpu.memory_space<vmem>>, %arg4: memref<1x8x32xbf16, #tpu.memory_space<vmem>>, %arg5: memref<32x32xbf16, #tpu.memory_space<vmem>>, %arg6: memref<1x32xf32, #tpu.memory_space<vmem>>, %arg7: memref<32x32xbf16, #tpu.memory_space<vmem>>, %arg8: memref<1x32xf32, #tpu.memory_space<vmem>>, %arg9: memref<32x32xbf16, #tpu.memory_space<vmem>>, %arg10: memref<1x32xf32, #tpu.memory_space<vmem>>, %arg11: memref<1x8x32xbf16, #tpu.memory_space<vmem>>, %arg12: memref<1x8x32xbf16, #tpu.memory_space<vmem>>, %arg13: memref<1x8x32xbf16, #tpu.memory_space<vmem>>) attributes {dimension_semantics = [#tpu.dimension_semantics<parallel>, #tpu.dimension_semantics<parallel>], iteration_bounds = array<i64: 2, 1>, scalar_prefetch = 0 : i64, scratch_operands = 0 : i64, tpu.core_type = #tpu.core_type<tc>, window_params = [{transform_indices = @transform_0, window_bounds = array<i64: 1, 8, 32>}, {transform_indices = @transform_1, window_bounds = array<i64: 1, 8, 32>}, {transform_indices = @transform_2, window_bounds = array<i64: 1, 8, 32>}, {pipeline_mode = #tpu.pipeline_mode<synchronous>, transform_indices = @transform_3, window_bounds = array<i64: 32, 32>}, {pipeline_mode = #tpu.pipeline_mode<synchronous>, transform_indices = @transform_4, window_bounds = array<i64: 1, 32>}, {pipeline_mode = #tpu.pipeline_mode<synchronous>, transform_indices = @transform_5, window_bounds = array<i64: 32, 32>}, {pipeline_mode = #tpu.pipeline_mode<synchronous>, transform_indices = @transform_6, window_bounds = array<i64: 1, 32>}, {pipeline_mode = #tpu.pipeline_mode<synchronous>, transform_indices = @transform_7, window_bounds = array<i64: 32, 32>}, {pipeline_mode = #tpu.pipeline_mode<synchronous>, transform_indices = @transform_8, window_bounds = array<i64: 1, 32>}, {transform_indices = @transform_9, window_bounds = array<i64: 1, 8, 32>}, {transform_indices = @transform_10, window_bounds = array<i64: 1, 8, 32>}, {transform_indices = @transform_11, window_bounds = array<i64: 1, 8, 32>}]} {
    %c0 = arith.constant 0 : index
    %c0_0 = arith.constant 0 : index
    %c0_1 = arith.constant 0 : index
    %0 = vector.load %arg2[%c0, %c0_0, %c0_1] : memref<1x8x32xbf16, #tpu.memory_space<vmem>>, vector<1x8x32xbf16>
    %1 = vector.shape_cast %0 : vector<1x8x32xbf16> to vector<8x32xbf16>
    %c0_2 = arith.constant 0 : index
    %c0_3 = arith.constant 0 : index
    %2 = vector.load %arg5[%c0_2, %c0_3] : memref<32x32xbf16, #tpu.memory_space<vmem>>, vector<32x32xbf16>
    %cst = arith.constant dense<0.000000e+00> : vector<8x32xf32>
    %3 = tpu.matmul %1, %2, %cst {dimension_numbers = #tpu.dot_dimension_numbers<[1], [0], [0], [1], [0, 0, 1, 1], [], []>} : vector<8x32xbf16>, vector<32x32xbf16>, vector<8x32xf32> -> vector<8x32xf32>
    %c0_4 = arith.constant 0 : index
    %c0_5 = arith.constant 0 : index
    %c0_6 = arith.constant 0 : index
    %4 = vector.load %arg3[%c0_4, %c0_5, %c0_6] : memref<1x8x32xbf16, #tpu.memory_space<vmem>>, vector<1x8x32xbf16>
    %5 = vector.shape_cast %4 : vector<1x8x32xbf16> to vector<8x32xbf16>
    %c0_7 = arith.constant 0 : index
    %c0_8 = arith.constant 0 : index
    %6 = vector.load %arg7[%c0_7, %c0_8] : memref<32x32xbf16, #tpu.memory_space<vmem>>, vector<32x32xbf16>
    %cst_9 = arith.constant dense<0.000000e+00> : vector<8x32xf32>
    %7 = tpu.matmul %5, %6, %cst_9 {dimension_numbers = #tpu.dot_dimension_numbers<[1], [0], [0], [1], [0, 0, 1, 1], [], []>} : vector<8x32xbf16>, vector<32x32xbf16>, vector<8x32xf32> -> vector<8x32xf32>
    %c0_10 = arith.constant 0 : index
    %c0_11 = arith.constant 0 : index
    %c0_12 = arith.constant 0 : index
    %8 = vector.load %arg4[%c0_10, %c0_11, %c0_12] : memref<1x8x32xbf16, #tpu.memory_space<vmem>>, vector<1x8x32xbf16>
    %9 = vector.shape_cast %8 : vector<1x8x32xbf16> to vector<8x32xbf16>
    %c0_13 = arith.constant 0 : index
    %c0_14 = arith.constant 0 : index
    %10 = vector.load %arg9[%c0_13, %c0_14] : memref<32x32xbf16, #tpu.memory_space<vmem>>, vector<32x32xbf16>
    %cst_15 = arith.constant dense<0.000000e+00> : vector<8x32xf32>
    %11 = tpu.matmul %9, %10, %cst_15 {dimension_numbers = #tpu.dot_dimension_numbers<[1], [0], [0], [1], [0, 0, 1, 1], [], []>} : vector<8x32xbf16>, vector<32x32xbf16>, vector<8x32xf32> -> vector<8x32xf32>
    %c0_16 = arith.constant 0 : index
    %c0_17 = arith.constant 0 : index
    %12 = vector.load %arg6[%c0_16, %c0_17] : memref<1x32xf32, #tpu.memory_space<vmem>>, vector<1x32xf32>
    %13 = vector.broadcast %12 : vector<1x32xf32> to vector<8x32xf32>
    %14 = arith.addf %3, %13 : vector<8x32xf32>
    %15 = arith.truncf %14 : vector<8x32xf32> to vector<8x32xbf16>
    %c0_18 = arith.constant 0 : index
    %c0_19 = arith.constant 0 : index
    %c0_20 = arith.constant 0 : index
    %16 = vector.load %arg11[%c0_18, %c0_19, %c0_20] : memref<1x8x32xbf16, #tpu.memory_space<vmem>>, vector<1x8x32xbf16>
    %17 = vector.shape_cast %16 : vector<1x8x32xbf16> to vector<8x32xbf16>
    %18 = vector.shape_cast %15 : vector<8x32xbf16> to vector<1x8x32xbf16>
    tpu.vector_store %arg11[%c0_18, %c0_19, %c0_20], %18 {strides = array<i32>} : memref<1x8x32xbf16, #tpu.memory_space<vmem>>, vector<1x8x32xbf16>,
    %c0_21 = arith.constant 0 : index
    %c0_22 = arith.constant 0 : index
    %19 = vector.load %arg8[%c0_21, %c0_22] : memref<1x32xf32, #tpu.memory_space<vmem>>, vector<1x32xf32>
    %20 = vector.broadcast %19 : vector<1x32xf32> to vector<8x32xf32>
    %21 = arith.addf %7, %20 : vector<8x32xf32>
    %22 = arith.truncf %21 : vector<8x32xf32> to vector<8x32xbf16>
    %c0_23 = arith.constant 0 : index
    %c0_24 = arith.constant 0 : index
    %c0_25 = arith.constant 0 : index
    %23 = vector.load %arg12[%c0_23, %c0_24, %c0_25] : memref<1x8x32xbf16, #tpu.memory_space<vmem>>, vector<1x8x32xbf16>
    %24 = vector.shape_cast %23 : vector<1x8x32xbf16> to vector<8x32xbf16>
    %25 = vector.shape_cast %22 : vector<8x32xbf16> to vector<1x8x32xbf16>
    tpu.vector_store %arg12[%c0_23, %c0_24, %c0_25], %25 {strides = array<i32>} : memref<1x8x32xbf16, #tpu.memory_space<vmem>>, vector<1x8x32xbf16>,
    %c0_26 = arith.constant 0 : index
    %c0_27 = arith.constant 0 : index
    %26 = vector.load %arg10[%c0_26, %c0_27] : memref<1x32xf32, #tpu.memory_space<vmem>>, vector<1x32xf32>
    %27 = vector.broadcast %26 : vector<1x32xf32> to vector<8x32xf32>
    %28 = arith.addf %11, %27 : vector<8x32xf32>
    %29 = arith.truncf %28 : vector<8x32xf32> to vector<8x32xbf16>
    %c0_28 = arith.constant 0 : index
    %c0_29 = arith.constant 0 : index
    %c0_30 = arith.constant 0 : index
    %30 = vector.load %arg13[%c0_28, %c0_29, %c0_30] : memref<1x8x32xbf16, #tpu.memory_space<vmem>>, vector<1x8x32xbf16>
    %31 = vector.shape_cast %30 : vector<1x8x32xbf16> to vector<8x32xbf16>
    %32 = vector.shape_cast %29 : vector<8x32xbf16> to vector<1x8x32xbf16>
    tpu.vector_store %arg13[%c0_28, %c0_29, %c0_30], %32 {strides = array<i32>} : memref<1x8x32xbf16, #tpu.memory_space<vmem>>, vector<1x8x32xbf16>,
    return
  }
  func.func @transform_0(%arg0: i32, %arg1: i32) -> (i32, i32, i32) {
    %c0_i32 = arith.constant 0 : i32
    %c0_i32_0 = arith.constant 0 : i32
    return %arg0, %arg1, %c0_i32 : i32, i32, i32
  }
  func.func @transform_1(%arg0: i32, %arg1: i32) -> (i32, i32, i32) {
    %c0_i32 = arith.constant 0 : i32
    %c0_i32_0 = arith.constant 0 : i32
    return %arg0, %arg1, %c0_i32 : i32, i32, i32
  }
  func.func @transform_2(%arg0: i32, %arg1: i32) -> (i32, i32, i32) {
    %c0_i32 = arith.constant 0 : i32
    %c0_i32_0 = arith.constant 0 : i32
    return %arg0, %arg1, %c0_i32 : i32, i32, i32
  }
  func.func @transform_3(%arg0: i32, %arg1: i32) -> (i32, i32) {
    %c0_i32 = arith.constant 0 : i32
    %c0_i32_0 = arith.constant 0 : i32
    %c0_i32_1 = arith.constant 0 : i32
    return %c0_i32, %c0_i32_0 : i32, i32
  }
  func.func @transform_4(%arg0: i32, %arg1: i32) -> (i32, i32) {
    %c0_i32 = arith.constant 0 : i32
    %c0_i32_0 = arith.constant 0 : i32
    %c0_i32_1 = arith.constant 0 : i32
    return %c0_i32, %c0_i32_0 : i32, i32
  }
  func.func @transform_5(%arg0: i32, %arg1: i32) -> (i32, i32) {
    %c0_i32 = arith.constant 0 : i32
    %c0_i32_0 = arith.constant 0 : i32
    %c0_i32_1 = arith.constant 0 : i32
    return %c0_i32, %c0_i32_0 : i32, i32
  }
  func.func @transform_6(%arg0: i32, %arg1: i32) -> (i32, i32) {
    %c0_i32 = arith.constant 0 : i32
    %c0_i32_0 = arith.constant 0 : i32
    %c0_i32_1 = arith.constant 0 : i32
    return %c0_i32, %c0_i32_0 : i32, i32
  }
  func.func @transform_7(%arg0: i32, %arg1: i32) -> (i32, i32) {
    %c0_i32 = arith.constant 0 : i32
    %c0_i32_0 = arith.constant 0 : i32
    %c0_i32_1 = arith.constant 0 : i32
    return %c0_i32, %c0_i32_0 : i32, i32
  }
  func.func @transform_8(%arg0: i32, %arg1: i32) -> (i32, i32) {
    %c0_i32 = arith.constant 0 : i32
    %c0_i32_0 = arith.constant 0 : i32
    %c0_i32_1 = arith.constant 0 : i32
    return %c0_i32, %c0_i32_0 : i32, i32
  }
  func.func @transform_9(%arg0: i32, %arg1: i32) -> (i32, i32, i32) {
    %c0_i32 = arith.constant 0 : i32
    %c0_i32_0 = arith.constant 0 : i32
    return %arg0, %arg1, %c0_i32 : i32, i32, i32
  }
  func.func @transform_10(%arg0: i32, %arg1: i32) -> (i32, i32, i32) {
    %c0_i32 = arith.constant 0 : i32
    %c0_i32_0 = arith.constant 0 : i32
    return %arg0, %arg1, %c0_i32 : i32, i32, i32
  }
  func.func @transform_11(%arg0: i32, %arg1: i32) -> (i32, i32, i32) {
    %c0_i32 = arith.constant 0 : i32
    %c0_i32_0 = arith.constant 0 : i32
    return %arg0, %arg1, %c0_i32 : i32, i32, i32
  }
}

</mosaic_0001>

<llo_original>
// kernel: tpu_custom_call.1
$region0: #{tpu_custom_call.1}
  #allocation0 [shape = 'u32[]', space=smem, size = 0x4, offset = 0x4, fixed_abs, tag = 'smem constant byte address 0x4 - core index']
  #allocation1 [shape = 'u32[72,128]{1,0:T(1,128)}', space=vmem, size = 0x9000, scoped, tag = 'internal scratch']
  %s0 = inlined_call_operand.hbm [shape: bf16[2,8,32], index: 0, kind: input, shape index: {}]
  %s1 = inlined_call_operand.hbm [shape: bf16[2,8,32], index: 1, kind: input, shape index: {}]
  %s2 = inlined_call_operand.hbm [shape: bf16[2,8,32], index: 2, kind: input, shape index: {}]
  %s3 = inlined_call_operand.hbm [shape: bf16[32,32], index: 3, kind: input, shape index: {}]
  %s4 = inlined_call_operand.vmem [shape: f32[1,32], index: 4, kind: input, shape index: {}]
  %s5 = inlined_call_operand.hbm [shape: bf16[32,32], index: 5, kind: input, shape index: {}]
  %s6 = inlined_call_operand.vmem [shape: f32[1,32], index: 6, kind: input, shape index: {}]
  %s7 = inlined_call_operand.hbm [shape: bf16[32,32], index: 7, kind: input, shape index: {}]
  %s8 = inlined_call_operand.vmem [shape: f32[1,32], index: 8, kind: input, shape index: {}]
  %s9 = inlined_call_operand.hbm [shape: bf16[2,8,32], index: 9, kind: output, shape index: {0}]
  %s10 = inlined_call_operand.hbm [shape: bf16[2,8,32], index: 10, kind: output, shape index: {1}]
  %s11 = inlined_call_operand.hbm [shape: bf16[2,8,32], index: 11, kind: output, shape index: {2}]
  %12 = xla_tuple %s9, %s10, %s11
  %s13 = sld [smem:[#allocation0]]
  $region109: #{tpu_custom_call.1} parent=0
    _
  %s15 = ssub.s32 1, %s13
  %s16 = scalar_select 0, %s15, %s13
  $region1: #{tpu_custom_call.1} parent=0
    #allocation2 [shape = 'u8[4096]{0}', space=vmem, size = 0x1000, scoped, tag = 'input window, operand 0']
    #allocation3 [shape = 's32[2]{0}', space=sflag, size = 0x8, scoped, tag = 'scoped memory for tpu_custom_call.1']
    #allocation4 [shape = 's32[2]{0}', space=sflag, size = 0x8, scoped, tag = 'scoped memory for tpu_custom_call.1']
    #allocation5 [shape = 'u8[4096]{0}', space=vmem, size = 0x1000, scoped, tag = 'input window, operand 1']
    #allocation6 [shape = 's32[2]{0}', space=sflag, size = 0x8, scoped, tag = 'scoped memory for tpu_custom_call.1']
    #allocation7 [shape = 'u8[4096]{0}', space=vmem, size = 0x1000, scoped, tag = 'input window, operand 2']
    #allocation8 [shape = 'u8[8192]{0}', space=vmem, size = 0x2000, scoped, tag = 'input window, operand 3, single buffered']
    #allocation9 [shape = 's32[1]{0}', space=sflag, size = 0x4, scoped, tag = 'scoped memory for tpu_custom_call.1']
    #allocation10 [shape = 'u8[8192]{0}', space=vmem, size = 0x2000, scoped, tag = 'input window, operand 5, single buffered']
    #allocation11 [shape = 'u8[8192]{0}', space=vmem, size = 0x2000, scoped, tag = 'input window, operand 7, single buffered']
    #allocation12 [shape = 's32[1]{0}', space=sflag, size = 0x4, scoped, tag = 'scoped memory for tpu_custom_call.1']
    #allocation13 [shape = 'u8[4096]{0}', space=vmem, size = 0x1000, scoped, tag = 'output window, operand 0']
    #allocation14 [shape = 'u8[4096]{0}', space=vmem, size = 0x1000, scoped, tag = 'output window, operand 1']
    #allocation15 [shape = 's32[2]{0}', space=sflag, size = 0x8, scoped, tag = 'scoped memory for tpu_custom_call.1']
    #allocation16 [shape = 'u8[4096]{0}', space=vmem, size = 0x1000, scoped, tag = 'output window, operand 2']
    %17 = vsyncpa [#allocation3], 0
    %s18 = scalar_lea.sflag [#allocation3], 1
    %19 = vsyncpa %s18, 0
    %20 = vsyncpa [#allocation6], 0
    %s21 = scalar_lea.sflag [#allocation6], 1
    %22 = vsyncpa %s21, 0
    %23 = vsyncpa [#allocation9], 0
    %24 = vsyncpa [#allocation12], 0
    %25 = vsyncpa [#allocation4], 0
    %s26 = scalar_lea.sflag [#allocation4], 1
    %27 = vsyncpa %s26, 0
    %28 = vsyncpa [#allocation15], 0
    %s29 = scalar_lea.sflag [#allocation15], 1
    %30 = vsyncpa %s29, 0
    loop: start=0, step=1, limit=4
    $region2: #{tpu_custom_call.1} parent=1 // loop_pre_header
      _
    $region3: #{tpu_custom_call.1} parent=1 // loop_header
      %s32 = sphi 0, %s36
      %p33 = scmp.ge.s32.totalorder %s32, 4
      %s39 = sphi 0, %s51
      %s40 = sphi 0, %s47
      %s41 = sphi 0, %s39
      %s42 = sphi 0, %s40
      %s43 = sphi 0, %s41
      %s44 = sphi 0, %s42
      %s56 = sphi 0, %s58
      %s59 = sphi 0, %s56
      %s60 = sphi 0, %s59
      %s76 = sphi 0, %s60
      %s84 = sphi 0, %s86
      %s87 = sphi 0, %s84
      %s88 = sphi 0, %s87
      %s104 = sphi 0, %s88
      %s112 = sphi 0, %s114
      %s115 = sphi 0, %s112
      %s116 = sphi 0, %s115
      %s132 = sphi 0, %s116
      %s136 = sphi 0, %s136
      %s138 = sphi 0, %s136
      %s139 = sphi 0, %s138
      %s153 = sphi 0, %s139
      %s157 = sphi 0, %s157
      %s159 = sphi 0, %s157
      %s160 = sphi 0, %s159
      %s174 = sphi 0, %s160
      %s178 = sphi 0, %s178
      %s180 = sphi 0, %s178
      %s181 = sphi 0, %s180
      %s195 = sphi 0, %s181
      %s199 = sphi 0, %s199
      %s201 = sphi 0, %s199
      %s202 = sphi 0, %s201
      %s216 = sphi 0, %s202
      %s220 = sphi 0, %s220
      %s222 = sphi 0, %s220
      %s223 = sphi 0, %s222
      %s237 = sphi 0, %s223
      %s241 = sphi 0, %s241
      %s243 = sphi 0, %s241
      %s244 = sphi 0, %s243
      %s258 = sphi 0, %s244
      %s266 = sphi 0, %s268
      %s269 = sphi 0, %s266
      %s270 = sphi 0, %s269
      %s286 = sphi 0, %s270
      %s294 = sphi 0, %s296
      %s297 = sphi 0, %s294
      %s298 = sphi 0, %s297
      %s314 = sphi 0, %s298
      %s322 = sphi 0, %s324
      %s325 = sphi 0, %s322
      %s326 = sphi 0, %s325
      %s342 = sphi 0, %s326
    $region4: #{tpu_custom_call.1} parent=1 // loop_header_branch
      %35 = sbr.rel (%p33) target = $region8
    $region5: #{tpu_custom_call.1} parent=1 // loop_body
      %s37 = ssub.s32 %s32, 1
      %s38 = ssub.s32 %s32, 2
      %s45 = sadd.s32 1, %s40
      %p46 = scmp.ge.s32.totalorder %s45, 1
      %s47 = scalar_select %p46, 0, %s45
      %s48 = sadd.s32 1, %s39
      %s49 = scalar_select %p46, %s48, %s39
      %p50 = scmp.ge.s32.totalorder %s49, 2
      %s51 = scalar_select %p50, 0, %s49
      %s52 = ssub.s32 %s39, %s51
      %s53 = ssub.s32 %s40, %s47
      %s54 = sor.u32 %s52, %s53
      %p55 = scmp.eq.s32.totalorder %s54, 0
      %s57 = sadd.s32 %s56, 1
      %s58 = scalar_select %p55, %s56, %s57
      %p61 = pneg %p55
      %p62 = scmp.eq.s32.totalorder %s32, 1
      %p63 = por %p61, %p62
      %p64 = scmp.ne.s32.totalorder %s56, %s59
      %p65 = scmp.eq.s32.totalorder %s32, 0
      %p66 = por %p64, %p65
      %p67 = scmp.ne.s32.totalorder %s56, %s59
      %p68 = scmp.eq.s32.totalorder %s37, 1
      %p69 = por %p67, %p68
      %p70 = scmp.ne.s32.totalorder %s59, %s60
      %p71 = scmp.eq.s32.totalorder %s37, 0
      %p72 = por %p70, %p71
      %p73 = scmp.ne.s32.totalorder %s59, %s60
      %p74 = scmp.eq.s32.totalorder %s38, 1
      %p75 = por %p73, %p74
      %p77 = scmp.ne.s32.totalorder %s60, %s76
      %p78 = scmp.eq.s32.totalorder %s38, 0
      %p79 = por %p77, %p78
      %s80 = ssub.s32 %s39, %s51
      %s81 = ssub.s32 %s40, %s47
      %s82 = sor.u32 %s80, %s81
      %p83 = scmp.eq.s32.totalorder %s82, 0
      %s85 = sadd.s32 %s84, 1
      %s86 = scalar_select %p83, %s84, %s85
      %p89 = pneg %p83
      %p90 = scmp.eq.s32.totalorder %s32, 1
      %p91 = por %p89, %p90
      %p92 = scmp.ne.s32.totalorder %s84, %s87
      %p93 = scmp.eq.s32.totalorder %s32, 0
      %p94 = por %p92, %p93
      %p95 = scmp.ne.s32.totalorder %s84, %s87
      %p96 = scmp.eq.s32.totalorder %s37, 1
      %p97 = por %p95, %p96
      %p98 = scmp.ne.s32.totalorder %s87, %s88
      %p99 = scmp.eq.s32.totalorder %s37, 0
      %p100 = por %p98, %p99
      %p101 = scmp.ne.s32.totalorder %s87, %s88
      %p102 = scmp.eq.s32.totalorder %s38, 1
      %p103 = por %p101, %p102
      %p105 = scmp.ne.s32.totalorder %s88, %s104
      %p106 = scmp.eq.s32.totalorder %s38, 0
      %p107 = por %p105, %p106
      %s108 = ssub.s32 %s39, %s51
      %s109 = ssub.s32 %s40, %s47
      %s110 = sor.u32 %s108, %s109
      %p111 = scmp.eq.s32.totalorder %s110, 0
      %s113 = sadd.s32 %s112, 1
      %s114 = scalar_select %p111, %s112, %s113
      %p117 = pneg %p111
      %p118 = scmp.eq.s32.totalorder %s32, 1
      %p119 = por %p117, %p118
      %p120 = scmp.ne.s32.totalorder %s112, %s115
      %p121 = scmp.eq.s32.totalorder %s32, 0
      %p122 = por %p120, %p121
      %p123 = scmp.ne.s32.totalorder %s112, %s115
      %p124 = scmp.eq.s32.totalorder %s37, 1
      %p125 = por %p123, %p124
      %p126 = scmp.ne.s32.totalorder %s115, %s116
      %p127 = scmp.eq.s32.totalorder %s37, 0
      %p128 = por %p126, %p127
      %p129 = scmp.ne.s32.totalorder %s115, %s116
      %p130 = scmp.eq.s32.totalorder %s38, 1
      %p131 = por %p129, %p130
      %p133 = scmp.ne.s32.totalorder %s116, %s132
      %p134 = scmp.eq.s32.totalorder %s38, 0
      %p135 = por %p133, %p134
      %s137 = sadd.s32 %s136, 1
      %p140 = scmp.eq.s32.totalorder %s32, 1
      %p141 = scmp.ne.s32.totalorder %s136, %s138
      %p142 = scmp.eq.s32.totalorder %s32, 0
      %p143 = por %p141, %p142
      %p144 = scmp.ne.s32.totalorder %s136, %s138
      %p145 = scmp.eq.s32.totalorder %s37, 1
      %p146 = por %p144, %p145
      %p147 = scmp.ne.s32.totalorder %s138, %s139
      %p148 = scmp.eq.s32.totalorder %s37, 0
      %p149 = por %p147, %p148
      %p150 = scmp.ne.s32.totalorder %s138, %s139
      %p151 = scmp.eq.s32.totalorder %s38, 1
      %p152 = por %p150, %p151
      %p154 = scmp.ne.s32.totalorder %s139, %s153
      %p155 = scmp.eq.s32.totalorder %s38, 0
      %p156 = por %p154, %p155
      %s158 = sadd.s32 %s157, 1
      %p161 = scmp.eq.s32.totalorder %s32, 1
      %p162 = scmp.ne.s32.totalorder %s157, %s159
      %p163 = scmp.eq.s32.totalorder %s32, 0
      %p164 = por %p162, %p163
      %p165 = scmp.ne.s32.totalorder %s157, %s159
      %p166 = scmp.eq.s32.totalorder %s37, 1
      %p167 = por %p165, %p166
      %p168 = scmp.ne.s32.totalorder %s159, %s160
      %p169 = scmp.eq.s32.totalorder %s37, 0
      %p170 = por %p168, %p169
      %p171 = scmp.ne.s32.totalorder %s159, %s160
      %p172 = scmp.eq.s32.totalorder %s38, 1
      %p173 = por %p171, %p172
      %p175 = scmp.ne.s32.totalorder %s160, %s174
      %p176 = scmp.eq.s32.totalorder %s38, 0
      %p177 = por %p175, %p176
      %s179 = sadd.s32 %s178, 1
      %p182 = scmp.eq.s32.totalorder %s32, 1
      %p183 = scmp.ne.s32.totalorder %s178, %s180
      %p184 = scmp.eq.s32.totalorder %s32, 0
      %p185 = por %p183, %p184
      %p186 = scmp.ne.s32.totalorder %s178, %s180
      %p187 = scmp.eq.s32.totalorder %s37, 1
      %p188 = por %p186, %p187
      %p189 = scmp.ne.s32.totalorder %s180, %s181
      %p190 = scmp.eq.s32.totalorder %s37, 0
      %p191 = por %p189, %p190
      %p192 = scmp.ne.s32.totalorder %s180, %s181
      %p193 = scmp.eq.s32.totalorder %s38, 1
      %p194 = por %p192, %p193
      %p196 = scmp.ne.s32.totalorder %s181, %s195
      %p197 = scmp.eq.s32.totalorder %s38, 0
      %p198 = por %p196, %p197
      %s200 = sadd.s32 %s199, 1
      %p203 = scmp.eq.s32.totalorder %s32, 1
      %p204 = scmp.ne.s32.totalorder %s199, %s201
      %p205 = scmp.eq.s32.totalorder %s32, 0
      %p206 = por %p204, %p205
      %p207 = scmp.ne.s32.totalorder %s199, %s201
      %p208 = scmp.eq.s32.totalorder %s37, 1
      %p209 = por %p207, %p208
      %p210 = scmp.ne.s32.totalorder %s201, %s202
      %p211 = scmp.eq.s32.totalorder %s37, 0
      %p212 = por %p210, %p211
      %p213 = scmp.ne.s32.totalorder %s201, %s202
      %p214 = scmp.eq.s32.totalorder %s38, 1
      %p215 = por %p213, %p214
      %p217 = scmp.ne.s32.totalorder %s202, %s216
      %p218 = scmp.eq.s32.totalorder %s38, 0
      %p219 = por %p217, %p218
      %s221 = sadd.s32 %s220, 1
      %p224 = scmp.eq.s32.totalorder %s32, 1
      %p225 = scmp.ne.s32.totalorder %s220, %s222
      %p226 = scmp.eq.s32.totalorder %s32, 0
      %p227 = por %p225, %p226
      %p228 = scmp.ne.s32.totalorder %s220, %s222
      %p229 = scmp.eq.s32.totalorder %s37, 1
      %p230 = por %p228, %p229
      %p231 = scmp.ne.s32.totalorder %s222, %s223
      %p232 = scmp.eq.s32.totalorder %s37, 0
      %p233 = por %p231, %p232
      %p234 = scmp.ne.s32.totalorder %s222, %s223
      %p235 = scmp.eq.s32.totalorder %s38, 1
      %p236 = por %p234, %p235
      %p238 = scmp.ne.s32.totalorder %s223, %s237
      %p239 = scmp.eq.s32.totalorder %s38, 0
      %p240 = por %p238, %p239
      %s242 = sadd.s32 %s241, 1
      %p245 = scmp.eq.s32.totalorder %s32, 1
      %p246 = scmp.ne.s32.totalorder %s241, %s243
      %p247 = scmp.eq.s32.totalorder %s32, 0
      %p248 = por %p246, %p247
      %p249 = scmp.ne.s32.totalorder %s241, %s243
      %p250 = scmp.eq.s32.totalorder %s37, 1
      %p251 = por %p249, %p250
      %p252 = scmp.ne.s32.totalorder %s243, %s244
      %p253 = scmp.eq.s32.totalorder %s37, 0
      %p254 = por %p252, %p253
      %p255 = scmp.ne.s32.totalorder %s243, %s244
      %p256 = scmp.eq.s32.totalorder %s38, 1
      %p257 = por %p255, %p256
      %p259 = scmp.ne.s32.totalorder %s244, %s258
      %p260 = scmp.eq.s32.totalorder %s38, 0
      %p261 = por %p259, %p260
      %s262 = ssub.s32 %s39, %s51
      %s263 = ssub.s32 %s40, %s47
      %s264 = sor.u32 %s262, %s263
      %p265 = scmp.eq.s32.totalorder %s264, 0
      %s267 = sadd.s32 %s266, 1
      %s268 = scalar_select %p265, %s266, %s267
      %p271 = pneg %p265
      %p272 = scmp.eq.s32.totalorder %s32, 1
      %p273 = por %p271, %p272
      %p274 = scmp.ne.s32.totalorder %s266, %s269
      %p275 = scmp.eq.s32.totalorder %s32, 0
      %p276 = por %p274, %p275
      %p277 = scmp.ne.s32.totalorder %s266, %s269
      %p278 = scmp.eq.s32.totalorder %s37, 1
      %p279 = por %p277, %p278
      %p280 = scmp.ne.s32.totalorder %s269, %s270
      %p281 = scmp.eq.s32.totalorder %s37, 0
      %p282 = por %p280, %p281
      %p283 = scmp.ne.s32.totalorder %s269, %s270
      %p284 = scmp.eq.s32.totalorder %s38, 1
      %p285 = por %p283, %p284
      %p287 = scmp.ne.s32.totalorder %s270, %s286
      %p288 = scmp.eq.s32.totalorder %s38, 0
      %p289 = por %p287, %p288
      %s290 = ssub.s32 %s39, %s51
      %s291 = ssub.s32 %s40, %s47
      %s292 = sor.u32 %s290, %s291
      %p293 = scmp.eq.s32.totalorder %s292, 0
      %s295 = sadd.s32 %s294, 1
      %s296 = scalar_select %p293, %s294, %s295
      %p299 = pneg %p293
      %p300 = scmp.eq.s32.totalorder %s32, 1
      %p301 = por %p299, %p300
      %p302 = scmp.ne.s32.totalorder %s294, %s297
      %p303 = scmp.eq.s32.totalorder %s32, 0
      %p304 = por %p302, %p303
      %p305 = scmp.ne.s32.totalorder %s294, %s297
      %p306 = scmp.eq.s32.totalorder %s37, 1
      %p307 = por %p305, %p306
      %p308 = scmp.ne.s32.totalorder %s297, %s298
      %p309 = scmp.eq.s32.totalorder %s37, 0
      %p310 = por %p308, %p309
      %p311 = scmp.ne.s32.totalorder %s297, %s298
      %p312 = scmp.eq.s32.totalorder %s38, 1
      %p313 = por %p311, %p312
      %p315 = scmp.ne.s32.totalorder %s298, %s314
      %p316 = scmp.eq.s32.totalorder %s38, 0
      %p317 = por %p315, %p316
      %s318 = ssub.s32 %s39, %s51
      %s319 = ssub.s32 %s40, %s47
      %s320 = sor.u32 %s318, %s319
      %p321 = scmp.eq.s32.totalorder %s320, 0
      %s323 = sadd.s32 %s322, 1
      %s324 = scalar_select %p321, %s322, %s323
      %p327 = pneg %p321
      %p328 = scmp.eq.s32.totalorder %s32, 1
      %p329 = por %p327, %p328
      %p330 = scmp.ne.s32.totalorder %s322, %s325
      %p331 = scmp.eq.s32.totalorder %s32, 0
      %p332 = por %p330, %p331
      %p333 = scmp.ne.s32.totalorder %s322, %s325
      %p334 = scmp.eq.s32.totalorder %s37, 1
      %p335 = por %p333, %p334
      %p336 = scmp.ne.s32.totalorder %s325, %s326
      %p337 = scmp.eq.s32.totalorder %s37, 0
      %p338 = por %p336, %p337
      %p339 = scmp.ne.s32.totalorder %s325, %s326
      %p340 = scmp.eq.s32.totalorder %s38, 1
      %p341 = por %p339, %p340
      %p343 = scmp.ne.s32.totalorder %s326, %s342
      %p344 = scmp.eq.s32.totalorder %s38, 0
      %p345 = por %p343, %p344
      %p346 = scmp.le.s32.totalorder 1, %s32
      %p347 = scmp.lt.s32.totalorder %s32, 3
      %p348 = pnand %p346, %p347
      %p349 = pneg %p348
      // Predicated region
      $region9: #{tpu_custom_call.1} parent=5 // pred_check
        _
      $region10: #{tpu_custom_call.1} parent=5 // pred_check_branch
        %351 = sbr.rel (%p348) target = $region12
      $region11: #{tpu_custom_call.1} parent=5 // pred_region
        %s352 = ssub.s32 %s32, 1
        // Predicated region
        $region13: #{tpu_custom_call.1} parent=11 // pred_check
          %p353 = pneg %p149
        $region14: #{tpu_custom_call.1} parent=11 // pred_check_branch
          %355 = sbr.rel (%p353) target = $region16
        $region15: #{tpu_custom_call.1} parent=11 // pred_region
          %357 = vsyncadd [#allocation9], 0
          %s358 = sshll.u32 %s3, 4
          %s359 = int_to_ptr.hbm [resolvable:$true] %s358
          %s360 = sshll.u32 [#allocation8], 4
          %s361 = int_to_ptr.vmem [resolvable:$true] %s360
          %366 = dma.hbm_to_vmem [thread:$0]  %s359, 256, %s361, [#allocation9], 64, 64, 4
        $region16: #{tpu_custom_call.1} parent=11 // pred_fallthru
          _
        // Predicated region
        $region17: #{tpu_custom_call.1} parent=11 // pred_check
          %p367 = pneg %p170
        $region18: #{tpu_custom_call.1} parent=11 // pred_check_branch
          %369 = sbr.rel (%p367) target = $region20
        $region19: #{tpu_custom_call.1} parent=11 // pred_region
          _
        $region20: #{tpu_custom_call.1} parent=11 // pred_fallthru
          _
        // Predicated region
        $region21: #{tpu_custom_call.1} parent=11 // pred_check
          %p370 = pneg %p191
        $region22: #{tpu_custom_call.1} parent=11 // pred_check_branch
          %372 = sbr.rel (%p370) target = $region24
        $region23: #{tpu_custom_call.1} parent=11 // pred_region
          %374 = vsyncadd [#allocation9], 0
          %s375 = sshll.u32 %s5, 4
          %s376 = int_to_ptr.hbm [resolvable:$true] %s375
          %s377 = sshll.u32 [#allocation10], 4
          %s378 = int_to_ptr.vmem [resolvable:$true] %s377
          %383 = dma.hbm_to_vmem [thread:$0]  %s376, 256, %s378, [#allocation9], 64, 64, 4
        $region24: #{tpu_custom_call.1} parent=11 // pred_fallthru
          _
        // Predicated region
        $region25: #{tpu_custom_call.1} parent=11 // pred_check
          %p384 = pneg %p212
        $region26: #{tpu_custom_call.1} parent=11 // pred_check_branch
          %386 = sbr.rel (%p384) target = $region28
        $region27: #{tpu_custom_call.1} parent=11 // pred_region
          _
        $region28: #{tpu_custom_call.1} parent=11 // pred_fallthru
          _
        // Predicated region
        $region29: #{tpu_custom_call.1} parent=11 // pred_check
          %p387 = pneg %p233
        $region30: #{tpu_custom_call.1} parent=11 // pred_check_branch
          %389 = sbr.rel (%p387) target = $region32
        $region31: #{tpu_custom_call.1} parent=11 // pred_region
          %391 = vsyncadd [#allocation12], 0
          %s392 = sshll.u32 %s7, 4
          %s393 = int_to_ptr.hbm [resolvable:$true] %s392
          %s394 = sshll.u32 [#allocation11], 4
          %s395 = int_to_ptr.vmem [resolvable:$true] %s394
          %400 = dma.hbm_to_vmem [thread:$0]  %s393, 256, %s395, [#allocation12], 64, 64, 4
        $region32: #{tpu_custom_call.1} parent=11 // pred_fallthru
          _
        // Predicated region
        $region33: #{tpu_custom_call.1} parent=11 // pred_check
          %p401 = pneg %p254
        $region34: #{tpu_custom_call.1} parent=11 // pred_check_branch
          %403 = sbr.rel (%p401) target = $region36
        $region35: #{tpu_custom_call.1} parent=11 // pred_region
          _
        $region36: #{tpu_custom_call.1} parent=11 // pred_fallthru
          _
      $region12: #{tpu_custom_call.1} parent=5 // pred_fallthru
        _
      %p404 = scmp.lt.s32.totalorder %s32, 2
      // Predicated region
      $region37: #{tpu_custom_call.1} parent=5 // pred_check
        %p405 = pneg %p404
      $region38: #{tpu_custom_call.1} parent=5 // pred_check_branch
        %407 = sbr.rel (%p405) target = $region40
      $region39: #{tpu_custom_call.1} parent=5 // pred_region
        // Predicated region
        $region41: #{tpu_custom_call.1} parent=39 // pred_check
          %p408 = pneg %p66
        $region42: #{tpu_custom_call.1} parent=39 // pred_check_branch
          %410 = sbr.rel (%p408) target = $region44
        $region43: #{tpu_custom_call.1} parent=39 // pred_region
          %s411 = sand.u32 %s56, 1
          %s412 = scalar_lea.sflag [#allocation3], %s411
          %s413 = sand.u32 %s56, 1
          %s414 = smul.addr %s413, 4
          %s415 = scalar_lea.vmem [#allocation2], %s414
          %417 = vsyncadd %s412, 0
          %s418 = sadd.s32 %s40, %s39
          %s419 = smul.addr %s418, 4
          %s420 = scalar_lea.hbm %s0, %s419
          %s422 = sshll.u32 %s420, 4
          %s423 = int_to_ptr.hbm [resolvable:$true] %s422
          %s424 = sshll.u32 %s415, 4
          %s425 = int_to_ptr.vmem [resolvable:$true] %s424
          %427 = dma.hbm_to_vmem [thread:$0]  %s423, 64, %s425, %s412
        $region44: #{tpu_custom_call.1} parent=39 // pred_fallthru
          _
        // Predicated region
        $region45: #{tpu_custom_call.1} parent=39 // pred_check
          %p428 = pneg %p94
        $region46: #{tpu_custom_call.1} parent=39 // pred_check_branch
          %430 = sbr.rel (%p428) target = $region48
        $region47: #{tpu_custom_call.1} parent=39 // pred_region
          %s431 = sand.u32 %s32, 1
          %s432 = scalar_lea.sflag [#allocation6], %s431
          %s433 = sand.u32 %s84, 1
          %s434 = smul.addr %s433, 4
          %s435 = scalar_lea.vmem [#allocation5], %s434
          %437 = vsyncadd %s432, 0
          %s438 = sadd.s32 %s40, %s39
          %s439 = smul.addr %s438, 4
          %s440 = scalar_lea.hbm %s1, %s439
          %s442 = sshll.u32 %s440, 4
          %s443 = int_to_ptr.hbm [resolvable:$true] %s442
          %s444 = sshll.u32 %s435, 4
          %s445 = int_to_ptr.vmem [resolvable:$true] %s444
          %447 = dma.hbm_to_vmem [thread:$0]  %s443, 64, %s445, %s432
        $region48: #{tpu_custom_call.1} parent=39 // pred_fallthru
          _
        // Predicated region
        $region49: #{tpu_custom_call.1} parent=39 // pred_check
          %p448 = pneg %p122
        $region50: #{tpu_custom_call.1} parent=39 // pred_check_branch
          %450 = sbr.rel (%p448) target = $region52
        $region51: #{tpu_custom_call.1} parent=39 // pred_region
          %s451 = sand.u32 %s32, 1
          %s452 = scalar_lea.sflag [#allocation6], %s451
          %s453 = sand.u32 %s112, 1
          %s454 = smul.addr %s453, 4
          %s455 = scalar_lea.vmem [#allocation7], %s454
          %457 = vsyncadd %s452, 0
          %s458 = sadd.s32 %s40, %s39
          %s459 = smul.addr %s458, 4
          %s460 = scalar_lea.hbm %s2, %s459
          %s462 = sshll.u32 %s460, 4
          %s463 = int_to_ptr.hbm [resolvable:$true] %s462
          %s464 = sshll.u32 %s455, 4
          %s465 = int_to_ptr.vmem [resolvable:$true] %s464
          %467 = dma.hbm_to_vmem [thread:$0]  %s463, 64, %s465, %s452
        $region52: #{tpu_custom_call.1} parent=39 // pred_fallthru
          _
      $region40: #{tpu_custom_call.1} parent=5 // pred_fallthru
        _
      %p468 = scmp.le.s32.totalorder 1, %s32
      %p469 = scmp.lt.s32.totalorder %s32, 3
      %p470 = pnand %p468, %p469
      %p471 = pneg %p470
      // Predicated region
      $region53: #{tpu_custom_call.1} parent=5 // pred_check
        _
      $region54: #{tpu_custom_call.1} parent=5 // pred_check_branch
        %473 = sbr.rel (%p470) target = $region56
      $region55: #{tpu_custom_call.1} parent=5 // pred_region
        %s474 = ssub.s32 %s32, 1
        %s475 = sand.u32 %s59, 1
        %s476 = scalar_lea.sflag [#allocation3], %s475
        %s477 = sand.u32 %s59, 1
        %s478 = smul.addr %s477, 4
        %s479 = scalar_lea.vmem [#allocation2], %s478
        // Predicated region
        $region57: #{tpu_custom_call.1} parent=55 // pred_check
          %p480 = pneg %p72
        $region58: #{tpu_custom_call.1} parent=55 // pred_check_branch
          %482 = sbr.rel (%p480) target = $region60
        $region59: #{tpu_custom_call.1} parent=55 // pred_region
          %484 = dma.done %s476, 64
        $region60: #{tpu_custom_call.1} parent=55 // pred_fallthru
          _
        %s485 = sand.u32 %s37, 1
        %s486 = scalar_lea.sflag [#allocation6], %s485
        %s487 = sand.u32 %s87, 1
        %s488 = smul.addr %s487, 4
        %s489 = scalar_lea.vmem [#allocation5], %s488
        // Predicated region
        $region61: #{tpu_custom_call.1} parent=55 // pred_check
          %p490 = pneg %p100
        $region62: #{tpu_custom_call.1} parent=55 // pred_check_branch
          %492 = sbr.rel (%p490) target = $region64
        $region63: #{tpu_custom_call.1} parent=55 // pred_region
          %494 = dma.done %s486, 64
        $region64: #{tpu_custom_call.1} parent=55 // pred_fallthru
          _
        %s495 = sand.u32 %s37, 1
        %s496 = scalar_lea.sflag [#allocation6], %s495
        %s497 = sand.u32 %s115, 1
        %s498 = smul.addr %s497, 4
        %s499 = scalar_lea.vmem [#allocation7], %s498
        // Predicated region
        $region65: #{tpu_custom_call.1} parent=55 // pred_check
          %p500 = pneg %p128
        $region66: #{tpu_custom_call.1} parent=55 // pred_check_branch
          %502 = sbr.rel (%p500) target = $region68
        $region67: #{tpu_custom_call.1} parent=55 // pred_region
          %504 = dma.done %s496, 64
        $region68: #{tpu_custom_call.1} parent=55 // pred_fallthru
          _
        // Predicated region
        $region69: #{tpu_custom_call.1} parent=55 // pred_check
          %p505 = pneg %p149
        $region70: #{tpu_custom_call.1} parent=55 // pred_check_branch
          %507 = sbr.rel (%p505) target = $region72
        $region71: #{tpu_custom_call.1} parent=55 // pred_region
          %509 = dma.done [#allocation9], 256
        $region72: #{tpu_custom_call.1} parent=55 // pred_fallthru
          _
        // Predicated region
        $region73: #{tpu_custom_call.1} parent=55 // pred_check
          %p510 = pneg %p191
        $region74: #{tpu_custom_call.1} parent=55 // pred_check_branch
          %512 = sbr.rel (%p510) target = $region76
        $region75: #{tpu_custom_call.1} parent=55 // pred_region
          %514 = dma.done [#allocation9], 256
        $region76: #{tpu_custom_call.1} parent=55 // pred_fallthru
          _
        // Predicated region
        $region77: #{tpu_custom_call.1} parent=55 // pred_check
          %p515 = pneg %p233
        $region78: #{tpu_custom_call.1} parent=55 // pred_check_branch
          %517 = sbr.rel (%p515) target = $region80
        $region79: #{tpu_custom_call.1} parent=55 // pred_region
          %519 = dma.done [#allocation12], 256
        $region80: #{tpu_custom_call.1} parent=55 // pred_fallthru
          _
        %s520 = sand.u32 %s59, 1
        %s521 = scalar_lea.sflag [#allocation3], %s520
        %s522 = sand.u32 %s59, 1
        %s523 = smul.addr %s522, 4
        %s524 = scalar_lea.vmem [#allocation2], %s523
        %p525 = pneg %p72
        %p526 = pneg %p69
        %s527 = sand.u32 %s37, 1
        %s528 = scalar_lea.sflag [#allocation6], %s527
        %s529 = sand.u32 %s87, 1
        %s530 = smul.addr %s529, 4
        %s531 = scalar_lea.vmem [#allocation5], %s530
        %p532 = pneg %p100
        %p533 = pneg %p97
        %s534 = sand.u32 %s37, 1
        %s535 = scalar_lea.sflag [#allocation6], %s534
        %s536 = sand.u32 %s115, 1
        %s537 = smul.addr %s536, 4
        %s538 = scalar_lea.vmem [#allocation7], %s537
        %p539 = pneg %p128
        %p540 = pneg %p125
        %p541 = pneg %p149
        %p542 = pneg %p146
        %p543 = pneg %p170
        %p544 = pneg %p167
        %p545 = pneg %p191
        %p546 = pneg %p188
        %p547 = pneg %p212
        %p548 = pneg %p209
        %p549 = pneg %p233
        %p550 = pneg %p230
        %p551 = pneg %p254
        %p552 = pneg %p251
        %p553 = pneg %p282
        %p554 = pneg %p279
        %s555 = sand.u32 %s269, 1
        %s556 = scalar_lea.sflag [#allocation4], %s555
        %s557 = sand.u32 %s269, 1
        %s558 = smul.addr %s557, 4
        %s559 = scalar_lea.vmem [#allocation13], %s558
        %p560 = pneg %p310
        %p561 = pneg %p307
        %s562 = sand.u32 %s37, 1
        %s563 = scalar_lea.sflag [#allocation15], %s562
        %s564 = sand.u32 %s297, 1
        %s565 = smul.addr %s564, 4
        %s566 = scalar_lea.vmem [#allocation14], %s565
        %p567 = pneg %p338
        %p568 = pneg %p335
        %s569 = sand.u32 %s37, 1
        %s570 = scalar_lea.sflag [#allocation15], %s569
        %s571 = sand.u32 %s325, 1
        %s572 = smul.addr %s571, 4
        %s573 = scalar_lea.vmem [#allocation16], %s572
        %v575 = vld [vmem:[%s479] sm:$0xf]
        %v576 = vld [vmem:[#allocation8] sm:$0xf]
        %v577 = vld [vmem:[#allocation8 + $0x4] sm:$0xf]
        %v578 = vld [vmem:[#allocation8 + $0x8] sm:$0xf]
        %v579 = vld [vmem:[#allocation8 + $0xc] sm:$0xf]
        %v580 = vld [vmem:[%s489] sm:$0xf]
        %v581 = vld [vmem:[#allocation10] sm:$0xf]
        %v582 = vld [vmem:[#allocation10 + $0x4] sm:$0xf]
        %v583 = vld [vmem:[#allocation10 + $0x8] sm:$0xf]
        %v584 = vld [vmem:[#allocation10 + $0xc] sm:$0xf]
        %v585 = vld [vmem:[%s499] sm:$0xf]
        %v586 = vld [vmem:[#allocation11] sm:$0xf]
        %v587 = vld [vmem:[#allocation11 + $0x4] sm:$0xf]
        %v588 = vld [vmem:[#allocation11 + $0x8] sm:$0xf]
        %v589 = vld [vmem:[#allocation11 + $0xc] sm:$0xf]
        %v590 = vld [vmem:[%s4] sm:$0x1]
        %v592 = vperm.slane %v590, 0
        %v598 = vunpack.c.l.b16 %v576
        %v599 = vunpack.c.l.b16 %v577
        %v600 = vunpack.c.l.b16 %v578
        %v601 = vunpack.c.l.b16 %v579
        %v602 = vpack.c.b16 %v599, %v598
        %v603 = vpack.c.b16 %v601, %v600
        %vm606 = vcmask 261120
        %v608 = vsel %vm606, %v575, 0
        %610 = vmatpush.bf16.msra.mxu0 0
        %611 = vmatpush.bf16.msra.mxu0 0
        %612 = vmatpush.bf16.msra.mxu0 0
        %613 = vmatpush.bf16.msra.mxu0 0
        %614 = vmatpush.bf16.msra.mxu0 0
        %615 = vmatpush.bf16.msra.mxu0 0
        %616 = vmatpush.bf16.msra.mxu0 %v603
        %617 = vmatpush.bf16.msra.mxu0 %v602
        %618 = vmatmul.bf16.gmra.mxu0 %v608
        %v619 = vpop.f32.mrf.mxu0
        %v620 = vadd.f32 %v592, %v619
        %v621 = vpop.f32.mrf.mxu0
        %622 = vdwg.mxu0
        %v623 = vpack.c.bf16 %v620, %v620
        %vm624 = vcmask 257024
        %625 = vst.msk [vmem:[%s559] sm:$0xf] %vm624, %v623
        %v626 = vld [vmem:[%s6] sm:$0x1]
        %v628 = vperm.slane %v626, 0
        %v634 = vunpack.c.l.b16 %v581
        %v635 = vunpack.c.l.b16 %v582
        %v636 = vunpack.c.l.b16 %v583
        %v637 = vunpack.c.l.b16 %v584
        %v638 = vpack.c.b16 %v635, %v634
        %v639 = vpack.c.b16 %v637, %v636
        %v643 = vsel %vm606, %v580, 0
        %645 = vmatpush.bf16.msra.mxu0 0
        %646 = vmatpush.bf16.msra.mxu0 0
        %647 = vmatpush.bf16.msra.mxu0 0
        %648 = vmatpush.bf16.msra.mxu0 0
        %649 = vmatpush.bf16.msra.mxu0 0
        %650 = vmatpush.bf16.msra.mxu0 0
        %651 = vmatpush.bf16.msra.mxu0 %v639
        %652 = vmatpush.bf16.msra.mxu0 %v638
        %653 = vmatmul.bf16.gmra.mxu0 %v643
        %v654 = vpop.f32.mrf.mxu0
        %v655 = vadd.f32 %v628, %v654
        %v656 = vpop.f32.mrf.mxu0
        %657 = vdwg.mxu0
        %v658 = vpack.c.bf16 %v655, %v655
        %659 = vst.msk [vmem:[%s566] sm:$0xf] %vm624, %v658
        %v660 = vld [vmem:[%s8] sm:$0x1]
        %v662 = vperm.slane %v660, 0
        %v668 = vunpack.c.l.b16 %v586
        %v669 = vunpack.c.l.b16 %v587
        %v670 = vunpack.c.l.b16 %v588
        %v671 = vunpack.c.l.b16 %v589
        %v672 = vpack.c.b16 %v669, %v668
        %v673 = vpack.c.b16 %v671, %v670
        %v677 = vsel %vm606, %v585, 0
        %679 = vmatpush.bf16.msra.mxu0 0
        %680 = vmatpush.bf16.msra.mxu0 0
        %681 = vmatpush.bf16.msra.mxu0 0
        %682 = vmatpush.bf16.msra.mxu0 0
        %683 = vmatpush.bf16.msra.mxu0 0
        %684 = vmatpush.bf16.msra.mxu0 0
        %685 = vmatpush.bf16.msra.mxu0 %v673
        %686 = vmatpush.bf16.msra.mxu0 %v672
        %687 = vmatmul.bf16.gmra.mxu0 %v677
        %v688 = vpop.f32.mrf.mxu0
        %v689 = vadd.f32 %v662, %v688
        %v690 = vpop.f32.mrf.mxu0
        %691 = vdwg.mxu0
        %v692 = vpack.c.bf16 %v689, %v689
        %693 = vst.msk [vmem:[%s573] sm:$0xf] %vm624, %v692
        %s694 = sand.u32 %s269, 1
        %s695 = scalar_lea.sflag [#allocation4], %s694
        %s696 = sand.u32 %s269, 1
        %s697 = smul.addr %s696, 4
        %s698 = scalar_lea.vmem [#allocation13], %s697
        %s699 = sand.u32 %s37, 1
        %s700 = scalar_lea.sflag [#allocation15], %s699
        %s701 = sand.u32 %s297, 1
        %s702 = smul.addr %s701, 4
        %s703 = scalar_lea.vmem [#allocation14], %s702
        %s704 = sand.u32 %s37, 1
        %s705 = scalar_lea.sflag [#allocation15], %s704
        %s706 = sand.u32 %s325, 1
        %s707 = smul.addr %s706, 4
        %s708 = scalar_lea.vmem [#allocation16], %s707
        // Predicated region
        $region81: #{tpu_custom_call.1} parent=55 // pred_check
          %p709 = pneg %p279
        $region82: #{tpu_custom_call.1} parent=55 // pred_check_branch
          %711 = sbr.rel (%p709) target = $region84
        $region83: #{tpu_custom_call.1} parent=55 // pred_region
          %713 = vsyncadd %s695, 0
          %s714 = sadd.s32 %s42, %s41
          %s715 = smul.addr %s714, 4
          %s716 = scalar_lea.hbm %s9, %s715
          %s718 = sshll.u32 %s698, 4
          %s719 = int_to_ptr.vmem [resolvable:$true] %s718
          %s720 = sshll.u32 %s716, 4
          %s721 = int_to_ptr.hbm [resolvable:$true] %s720
          %723 = dma.vmem_to_hbm [thread:$0]  %s719, 64, %s721, %s695
        $region84: #{tpu_custom_call.1} parent=55 // pred_fallthru
          _
        // Predicated region
        $region85: #{tpu_custom_call.1} parent=55 // pred_check
          %p724 = pneg %p307
        $region86: #{tpu_custom_call.1} parent=55 // pred_check_branch
          %726 = sbr.rel (%p724) target = $region88
        $region87: #{tpu_custom_call.1} parent=55 // pred_region
          %728 = vsyncadd %s700, 0
          %s729 = sadd.s32 %s42, %s41
          %s730 = smul.addr %s729, 4
          %s731 = scalar_lea.hbm %s10, %s730
          %s733 = sshll.u32 %s703, 4
          %s734 = int_to_ptr.vmem [resolvable:$true] %s733
          %s735 = sshll.u32 %s731, 4
          %s736 = int_to_ptr.hbm [resolvable:$true] %s735
          %738 = dma.vmem_to_hbm [thread:$0]  %s734, 64, %s736, %s700
        $region88: #{tpu_custom_call.1} parent=55 // pred_fallthru
          _
        // Predicated region
        $region89: #{tpu_custom_call.1} parent=55 // pred_check
          %p739 = pneg %p335
        $region90: #{tpu_custom_call.1} parent=55 // pred_check_branch
          %741 = sbr.rel (%p739) target = $region92
        $region91: #{tpu_custom_call.1} parent=55 // pred_region
          %743 = vsyncadd %s705, 0
          %s744 = sadd.s32 %s42, %s41
          %s745 = smul.addr %s744, 4
          %s746 = scalar_lea.hbm %s11, %s745
          %s748 = sshll.u32 %s708, 4
          %s749 = int_to_ptr.vmem [resolvable:$true] %s748
          %s750 = sshll.u32 %s746, 4
          %s751 = int_to_ptr.hbm [resolvable:$true] %s750
          %753 = dma.vmem_to_hbm [thread:$0]  %s749, 64, %s751, %s705
        $region92: #{tpu_custom_call.1} parent=55 // pred_fallthru
          _
      $region56: #{tpu_custom_call.1} parent=5 // pred_fallthru
        _
      %p754 = scmp.le.s32.totalorder 2, %s32
      // Predicated region
      $region93: #{tpu_custom_call.1} parent=5 // pred_check
        %p755 = pneg %p754
      $region94: #{tpu_custom_call.1} parent=5 // pred_check_branch
        %757 = sbr.rel (%p755) target = $region96
      $region95: #{tpu_custom_call.1} parent=5 // pred_region
        %s758 = ssub.s32 %s32, 2
        // Predicated region
        $region97: #{tpu_custom_call.1} parent=95 // pred_check
          %p759 = pneg %p285
        $region98: #{tpu_custom_call.1} parent=95 // pred_check_branch
          %761 = sbr.rel (%p759) target = $region100
        $region99: #{tpu_custom_call.1} parent=95 // pred_region
          %s762 = sand.u32 %s270, 1
          %s763 = scalar_lea.sflag [#allocation4], %s762
          %s764 = sand.u32 %s270, 1
          %s765 = smul.addr %s764, 4
          %s766 = scalar_lea.vmem [#allocation13], %s765
          %768 = dma.done %s763, 64
        $region100: #{tpu_custom_call.1} parent=95 // pred_fallthru
          _
        // Predicated region
        $region101: #{tpu_custom_call.1} parent=95 // pred_check
          %p769 = pneg %p313
        $region102: #{tpu_custom_call.1} parent=95 // pred_check_branch
          %771 = sbr.rel (%p769) target = $region104
        $region103: #{tpu_custom_call.1} parent=95 // pred_region
          %s772 = sand.u32 %s38, 1
          %s773 = scalar_lea.sflag [#allocation15], %s772
          %s774 = sand.u32 %s298, 1
          %s775 = smul.addr %s774, 4
          %s776 = scalar_lea.vmem [#allocation14], %s775
          %778 = dma.done %s773, 64
        $region104: #{tpu_custom_call.1} parent=95 // pred_fallthru
          _
        // Predicated region
        $region105: #{tpu_custom_call.1} parent=95 // pred_check
          %p779 = pneg %p341
        $region106: #{tpu_custom_call.1} parent=95 // pred_check_branch
          %781 = sbr.rel (%p779) target = $region108
        $region107: #{tpu_custom_call.1} parent=95 // pred_region
          %s782 = sand.u32 %s38, 1
          %s783 = scalar_lea.sflag [#allocation15], %s782
          %s784 = sand.u32 %s326, 1
          %s785 = smul.addr %s784, 4
          %s786 = scalar_lea.vmem [#allocation16], %s785
          %788 = dma.done %s783, 64
        $region108: #{tpu_custom_call.1} parent=95 // pred_fallthru
          _
      $region96: #{tpu_custom_call.1} parent=5 // pred_fallthru
        _
    $region6: #{tpu_custom_call.1} parent=1 // loop_footer
      %s36 = sadd.s32 1, %s32
    $region7: #{tpu_custom_call.1} parent=1 // loop_footer_branch
      %31 = sbr.rel target = $region3
    $region8: #{tpu_custom_call.1} parent=1 // loop_exit
      _
    %789 = vsyncpa [#allocation3], 1
    %s790 = scalar_lea.sflag [#allocation3], 1
    %791 = vsyncpa %s790, 1
    %792 = vsyncpa [#allocation6], 1
    %s793 = scalar_lea.sflag [#allocation6], 1
    %794 = vsyncpa %s793, 1
    %795 = vsyncpa [#allocation9], 1
    %796 = vsyncpa [#allocation12], 1
    %797 = vsyncpa [#allocation4], 1
    %s798 = scalar_lea.sflag [#allocation4], 1
    %799 = vsyncpa %s798, 1
    %800 = vsyncpa [#allocation15], 1
    %s801 = scalar_lea.sflag [#allocation15], 1
    %802 = vsyncpa %s801, 1

</llo_original>
